<compile_context>
chip_gen: v5e
topology: v5e:2x2
jax: 0.10.0
libtpu: 0.0.40
codegen_flags: <defaults>
</compile_context>

<pallas_src>
import functools

import jax
import jax.numpy as jnp
from jax.experimental import pallas as pl
from jax.experimental.pallas import tpu as pltpu

HIDDEN_FEATURES = 20
LIN1_OUT = 100
TB_DEFAULT = 8192  # batch tile upper bound; ~16-20 MiB working set at 8192


def _round_up(n, m):
    return (n + m - 1) // m * m


def _mlp_kernel(x_ref, w1_ref, b1_ref, w2_ref, b2_ref, w3_ref, b3_ref, o_ref):
    # x arrives f32 (tb, F); cast to bf16 in VMEM right before the MXU so the
    # HBM stream stays a single f32 read (no separate wrapper-side cast pass).
    x = x_ref[...].astype(jnp.bfloat16)

    # Layer 1: bf16 MXU matmul, f32 accumulation; f32 epilogue.
    h1 = jnp.dot(x, w1_ref[...], preferred_element_type=jnp.float32)
    h1 = jnp.maximum(h1 + b1_ref[...], 0.0)                     # (TB, 100) f32

    # Layer 2: bf16 into the MXU, f32 epilogue.
    h2 = jnp.dot(h1.astype(jnp.bfloat16), w2_ref[...],
                 preferred_element_type=jnp.float32)
    h2 = jnp.maximum(h2 + b2_ref[...], 0.0)                     # (TB, H) f32
    # TODO(synk): if profiling shows the (TB,20)->128-lane-padded epilogue
    # saturating VALU/ld-st slots, restructure layers 2-3 feature-major.

    # Layer 3 as (1,H) . (TB,H)^T -> (1,TB) via an explicit transposed-RHS
    # contraction (no materialized h2 transpose); result is lane-dense along
    # the batch, so the store below is an unmasked full-lane write.
    z = jax.lax.dot_general(
        w3_ref[...], h2,
        dimension_numbers=(((1,), (1,)), ((), ())),
        preferred_element_type=jnp.float32)                     # (1, TB) f32
    z = z + b3_ref[0]                                           # SMEM scalar

    o_ref[...] = jax.nn.sigmoid(z).astype(o_ref.dtype)          # (1, TB)


@functools.partial(jax.jit, static_argnames=("block_b",))
def binary_nn_forward(x, w1, b1, w2, b2, w3, b3, *, block_b=TB_DEFAULT):
    """Forward pass of BinaryNN.

    Args (PyTorch nn.Linear layouts):
      x:  (B, F) float32
      w1: (100, F), b1: (100,)
      w2: (H, 100), b2: (H,)
      w3: (1, H),   b3: (1,)
    Returns:
      (B, 1) float32 sigmoid probabilities.
    """
    B, F = x.shape

    # Adaptive batch tile (multiple of 128 for lane-dense output rows):
    #   * aim for >= 4 tiles when the batch is big enough (keeps both v7x
    #     TensorCores fed via the "parallel" axis and the DMA pipeline busy),
    #   * cap at block_b, then rebalance so the last ragged tile is small.
    tb = min(block_b, max(128, _round_up(pl.cdiv(B, 4), 128)))
    num_tiles = pl.cdiv(B, tb)
    tb = max(128, _round_up(pl.cdiv(B, num_tiles), 128))

    # Weights are tiny: transpose/cast once in the wrapper, resident in VMEM.
    w1_t = jnp.transpose(w1).astype(jnp.bfloat16)      # (F, 100)
    w2_t = jnp.transpose(w2).astype(jnp.bfloat16)      # (100, H)
    w3_r = w3.astype(jnp.float32)                      # (1, H)  tiny: keep f32
    b1_r = b1.reshape(1, -1).astype(jnp.float32)       # (1, 100)
    b2_r = b2.reshape(1, -1).astype(jnp.float32)       # (1, H)
    b3_r = b3.reshape(-1).astype(jnp.float32)          # (1,) -> SMEM scalar

    n100 = w1_t.shape[1]
    nh = w2_t.shape[1]

    # Advisory scheduling hint for XLA.
    flops = 2 * B * (F * n100 + n100 * nh + nh * 1)
    bytes_accessed = (B * F * 4 + B * 4
                      + w1_t.size * 2 + w2_t.size * 2
                      + (w3_r.size + b1_r.size + b2_r.size + b3_r.size) * 4)
    cost = pl.CostEstimate(flops=flops, transcendentals=B,
                           bytes_accessed=bytes_accessed)

    # Default scoped VMEM (32 MiB) covers tb <= 8192; only raise for bigger
    # sweeps (stay well under v7x's 64 MiB physical VMEM).
    vmem_limit = 48 * 1024 * 1024 if tb > 8192 else None

    out_row = pl.pallas_call(
        _mlp_kernel,
        out_shape=jax.ShapeDtypeStruct((1, B), jnp.float32),
        grid=(num_tiles,),
        in_specs=[
            pl.BlockSpec((tb, F), lambda i: (i, 0)),        # x: f32, streamed
            pl.BlockSpec((F, n100), lambda i: (0, 0)),      # weights/biases:
            pl.BlockSpec((1, n100), lambda i: (0, 0)),      # constant index map
            pl.BlockSpec((n100, nh), lambda i: (0, 0)),     # -> DMA'd once,
            pl.BlockSpec((1, nh), lambda i: (0, 0)),        # resident in VMEM
            pl.BlockSpec((1, nh), lambda i: (0, 0)),
            pl.BlockSpec(memory_space=pltpu.MemorySpace.SMEM),  # b3 scalar
        ],
        out_specs=pl.BlockSpec((1, tb), lambda i: (0, i)),  # lane-dense row
        compiler_params=pltpu.CompilerParams(
            dimension_semantics=("parallel",),
            vmem_limit_bytes=vmem_limit),
        cost_estimate=cost,
    )(x.astype(jnp.float32), w1_t, b1_r, w2_t, b2_r, w3_r, b3_r)

    # (1, B) row-major -> (B, 1): pure metadata reshape.
    return out_row.reshape(B, 1)


def init_params(key, num_features, hidden_features):
    """Deterministic init matching PyTorch nn.Linear shapes (out, in)."""
    k1, k2, k3, k4, k5, k6 = jax.random.split(key, 6)

    def uniform(k, shape, fan_in):
        bound = 1.0 / jnp.sqrt(jnp.asarray(fan_in, jnp.float32))
        return jax.random.uniform(k, shape, jnp.float32, -bound, bound)

    w1 = uniform(k1, (LIN1_OUT, num_features), num_features)
    b1 = uniform(k2, (LIN1_OUT,), num_features)
    w2 = uniform(k3, (hidden_features, LIN1_OUT), LIN1_OUT)
    b2 = uniform(k4, (hidden_features,), LIN1_OUT)
    w3 = uniform(k5, (1, hidden_features), hidden_features)
    b3 = uniform(k6, (1,), hidden_features)
    return w1, b1, w2, b2, w3, b3


if __name__ == "__main__":
    NUM_FEATURES = 32   # stand-in for comp_data.X.shape[1]
    BATCH = 300         # small; exercises a multi-tile grid + ragged last block

    key = jax.random.PRNGKey(0)
    kx, kp = jax.random.split(key)

    x = jax.random.normal(kx, (BATCH, NUM_FEATURES), jnp.float32)
    params = init_params(kp, NUM_FEATURES, HIDDEN_FEATURES)

    out = binary_nn_forward(x, *params)
    out = jax.block_until_ready(out)

    # Pure-JAX f32 reference (kernel feeds the MXU bf16 -> loose tolerance).
    w1, b1, w2, b2, w3, b3 = params
    h1 = jnp.maximum(x @ w1.T + b1, 0.0)
    h2 = jnp.maximum(h1 @ w2.T + b2, 0.0)
    ref = jax.nn.sigmoid(h2 @ w3.T + b3)

    assert out.shape == (BATCH, 1), out.shape
    assert jnp.allclose(out, ref, atol=2e-2, rtol=0.0), (
        float(jnp.max(jnp.abs(out - ref))))

    print("KERNEL_OK")
</pallas_src>

<mosaic_0001>
module attributes {stable_mosaic.version = 11 : i64} {
  func.func @_mlp_kernel(%arg0: i32, %arg1: memref<128x32xf32, #tpu.memory_space<vmem>>, %arg2: memref<32x100xbf16, #tpu.memory_space<vmem>>, %arg3: memref<1x100xf32, #tpu.memory_space<vmem>>, %arg4: memref<100x20xbf16, #tpu.memory_space<vmem>>, %arg5: memref<1x20xf32, #tpu.memory_space<vmem>>, %arg6: memref<1x20xf32, #tpu.memory_space<vmem>>, %arg7: memref<1xf32, #tpu.memory_space<smem>>, %arg8: memref<1x128xf32, #tpu.memory_space<vmem>>) attributes {dimension_semantics = [#tpu.dimension_semantics<parallel>], iteration_bounds = array<i64: 3>, scalar_prefetch = 0 : i64, scratch_operands = 0 : i64, tpu.core_type = #tpu.core_type<tc>, window_params = [{transform_indices = @transform_0, window_bounds = array<i64: 128, 32>}, {pipeline_mode = #tpu.pipeline_mode<synchronous>, transform_indices = @transform_1, window_bounds = array<i64: 32, 100>}, {pipeline_mode = #tpu.pipeline_mode<synchronous>, transform_indices = @transform_2, window_bounds = array<i64: 1, 100>}, {pipeline_mode = #tpu.pipeline_mode<synchronous>, transform_indices = @transform_3, window_bounds = array<i64: 100, 20>}, {pipeline_mode = #tpu.pipeline_mode<synchronous>, transform_indices = @transform_4, window_bounds = array<i64: 1, 20>}, {pipeline_mode = #tpu.pipeline_mode<synchronous>, transform_indices = @transform_5, window_bounds = array<i64: 1, 20>}, {transform_indices = @transform_6, window_bounds = array<i64: 1>}, {transform_indices = @transform_7, window_bounds = array<i64: 1, 128>}]} {
    %c0 = arith.constant 0 : index
    %c0_0 = arith.constant 0 : index
    %0 = vector.load %arg1[%c0, %c0_0] : memref<128x32xf32, #tpu.memory_space<vmem>>, vector<128x32xf32>
    %1 = arith.truncf %0 : vector<128x32xf32> to vector<128x32xbf16>
    %c0_1 = arith.constant 0 : index
    %c0_2 = arith.constant 0 : index
    %2 = vector.load %arg2[%c0_1, %c0_2] : memref<32x100xbf16, #tpu.memory_space<vmem>>, vector<32x100xbf16>
    %cst = arith.constant dense<0.000000e+00> : vector<128x100xf32>
    %3 = tpu.matmul %1, %2, %cst {dimension_numbers = #tpu.dot_dimension_numbers<[1], [0], [0], [1], [0, 0, 1, 1], [], []>} : vector<128x32xbf16>, vector<32x100xbf16>, vector<128x100xf32> -> vector<128x100xf32>
    %c0_3 = arith.constant 0 : index
    %c0_4 = arith.constant 0 : index
    %4 = vector.load %arg3[%c0_3, %c0_4] : memref<1x100xf32, #tpu.memory_space<vmem>>, vector<1x100xf32>
    %5 = vector.broadcast %4 : vector<1x100xf32> to vector<128x100xf32>
    %6 = arith.addf %3, %5 : vector<128x100xf32>
    %cst_5 = arith.constant 0.000000e+00 : f32
    %7 = vector.broadcast %cst_5 : f32 to vector<128x100xf32>
    %8 = arith.maximumf %6, %7 : vector<128x100xf32>
    %9 = arith.truncf %8 : vector<128x100xf32> to vector<128x100xbf16>
    %c0_6 = arith.constant 0 : index
    %c0_7 = arith.constant 0 : index
    %10 = vector.load %arg4[%c0_6, %c0_7] : memref<100x20xbf16, #tpu.memory_space<vmem>>, vector<100x20xbf16>
    %cst_8 = arith.constant dense<0.000000e+00> : vector<128x20xf32>
    %11 = tpu.matmul %9, %10, %cst_8 {dimension_numbers = #tpu.dot_dimension_numbers<[1], [0], [0], [1], [0, 0, 1, 1], [], []>} : vector<128x100xbf16>, vector<100x20xbf16>, vector<128x20xf32> -> vector<128x20xf32>
    %c0_9 = arith.constant 0 : index
    %c0_10 = arith.constant 0 : index
    %12 = vector.load %arg5[%c0_9, %c0_10] : memref<1x20xf32, #tpu.memory_space<vmem>>, vector<1x20xf32>
    %13 = vector.broadcast %12 : vector<1x20xf32> to vector<128x20xf32>
    %14 = arith.addf %11, %13 : vector<128x20xf32>
    %cst_11 = arith.constant 0.000000e+00 : f32
    %15 = vector.broadcast %cst_11 : f32 to vector<128x20xf32>
    %16 = arith.maximumf %14, %15 : vector<128x20xf32>
    %c0_12 = arith.constant 0 : index
    %c0_13 = arith.constant 0 : index
    %17 = vector.load %arg6[%c0_12, %c0_13] : memref<1x20xf32, #tpu.memory_space<vmem>>, vector<1x20xf32>
    %cst_14 = arith.constant dense<0.000000e+00> : vector<1x128xf32>
    %18 = tpu.matmul %17, %16, %cst_14 {dimension_numbers = #tpu.dot_dimension_numbers<[1], [1], [0], [0], [0, 0, 1, 0], [], []>} : vector<1x20xf32>, vector<128x20xf32>, vector<1x128xf32> -> vector<1x128xf32>
    %c0_15 = arith.constant 0 : index
    %19 = memref.load %arg7[%c0_15] : memref<1xf32, #tpu.memory_space<smem>>
    %20 = vector.broadcast %19 : f32 to vector<1x128xf32>
    %21 = arith.addf %18, %20 : vector<1x128xf32>
    %22 = arith.negf %21 : vector<1x128xf32>
    %23 = math.exp %22 : vector<1x128xf32>
    %cst_16 = arith.constant 1.000000e+00 : f32
    %24 = vector.broadcast %cst_16 : f32 to vector<1x128xf32>
    %25 = arith.addf %24, %23 : vector<1x128xf32>
    %26 = arith.divf %24, %25 : vector<1x128xf32>
    %c0_17 = arith.constant 0 : index
    %c0_18 = arith.constant 0 : index
    %27 = vector.load %arg8[%c0_17, %c0_18] : memref<1x128xf32, #tpu.memory_space<vmem>>, vector<1x128xf32>
    tpu.vector_store %arg8[%c0_17, %c0_18], %26 {strides = array<i32>} : memref<1x128xf32, #tpu.memory_space<vmem>>, vector<1x128xf32>,
    return
  }
  func.func @transform_0(%arg0: i32) -> (i32, i32) {
    %c0_i32 = arith.constant 0 : i32
    %c0_i32_0 = arith.constant 0 : i32
    return %arg0, %c0_i32 : i32, i32
  }
  func.func @transform_1(%arg0: i32) -> (i32, i32) {
    %c0_i32 = arith.constant 0 : i32
    %c0_i32_0 = arith.constant 0 : i32
    %c0_i32_1 = arith.constant 0 : i32
    return %c0_i32, %c0_i32_0 : i32, i32
  }
  func.func @transform_2(%arg0: i32) -> (i32, i32) {
    %c0_i32 = arith.constant 0 : i32
    %c0_i32_0 = arith.constant 0 : i32
    %c0_i32_1 = arith.constant 0 : i32
    return %c0_i32, %c0_i32_0 : i32, i32
  }
  func.func @transform_3(%arg0: i32) -> (i32, i32) {
    %c0_i32 = arith.constant 0 : i32
    %c0_i32_0 = arith.constant 0 : i32
    %c0_i32_1 = arith.constant 0 : i32
    return %c0_i32, %c0_i32_0 : i32, i32
  }
  func.func @transform_4(%arg0: i32) -> (i32, i32) {
    %c0_i32 = arith.constant 0 : i32
    %c0_i32_0 = arith.constant 0 : i32
    %c0_i32_1 = arith.constant 0 : i32
    return %c0_i32, %c0_i32_0 : i32, i32
  }
  func.func @transform_5(%arg0: i32) -> (i32, i32) {
    %c0_i32 = arith.constant 0 : i32
    %c0_i32_0 = arith.constant 0 : i32
    %c0_i32_1 = arith.constant 0 : i32
    return %c0_i32, %c0_i32_0 : i32, i32
  }
  func.func @transform_6(%arg0: i32) -> i32 {
    %c0_i32 = arith.constant 0 : i32
    %c0_i32_0 = arith.constant 0 : i32
    return %c0_i32 : i32
  }
  func.func @transform_7(%arg0: i32) -> (i32, i32) {
    %c0_i32 = arith.constant 0 : i32
    %c0_i32_0 = arith.constant 0 : i32
    return %c0_i32, %arg0 : i32, i32
  }
}

</mosaic_0001>

<llo_original>
// kernel: binary_nn_forward.1
$region0: #{binary_nn_forward.1}
  #allocation0 [shape = 'u32[]', space=smem, size = 0x4, offset = 0x4, fixed_abs, tag = 'smem constant byte address 0x4 - core index']
  #allocation1 [shape = 'u32[72,128]{1,0:T(1,128)}', space=vmem, size = 0x9000, scoped, tag = 'internal scratch']
  #allocation2 [shape = 'f32[1]{0:T(128)S(6)}', space=smem, size = 0x200, scoped, tag = 'scoped memory for binary_nn_forward.1']
  %s0 = inlined_call_operand.vmem [shape: f32[300,32], index: 0, kind: input, shape index: {}]
  %s1 = inlined_call_operand.vmem [shape: bf16[32,100], index: 1, kind: input, shape index: {}]
  %s2 = inlined_call_operand.vmem [shape: f32[1,100], index: 2, kind: input, shape index: {}]
  %s3 = inlined_call_operand.vmem [shape: bf16[100,20], index: 3, kind: input, shape index: {}]
  %s4 = inlined_call_operand.vmem [shape: f32[1,20], index: 4, kind: input, shape index: {}]
  %s5 = inlined_call_operand.vmem [shape: f32[1,20], index: 5, kind: input, shape index: {}]
  %s6 = inlined_call_operand.<no memory space> [shape: f32[1], index: 6, kind: input, shape index: {}]
  %s7 = inlined_call_operand.hbm [shape: f32[1,300], index: 7, kind: output, shape index: {}]
  %s8 = sld [smem:[#allocation0]]
  $region61: #{binary_nn_forward.1} parent=0
    _
  %s10 = ssub.s32 1, %s8
  %s11 = scalar_select 0, %s10, %s8
  %12 = sst [smem:[#allocation2]] %s6
  $region1: #{binary_nn_forward.1} parent=0
    #allocation3 [shape = 'u8[1024]{0}', space=vmem, size = 0x400, scoped, tag = 'output window, operand 0']
    #allocation4 [shape = 's32[2]{0}', space=sflag, size = 0x8, scoped, tag = 'scoped memory for binary_nn_forward.1']
    %13 = vsyncpa [#allocation4], 0
    %s14 = scalar_lea.sflag [#allocation4], 1
    %15 = vsyncpa %s14, 0
    loop: start=0, step=1, limit=5
    $region2: #{binary_nn_forward.1} parent=1 // loop_pre_header
      _
    $region3: #{binary_nn_forward.1} parent=1 // loop_header
      %s17 = sphi 0, %s21
      %p18 = scmp.ge.s32.totalorder %s17, 5
      %s27 = sphi 0, %s29
      %s30 = sphi 0, %s27
      %s31 = sphi 0, %s30
      %s47 = sphi 0, %s31
      %s51 = sphi 0, %s51
      %s53 = sphi 0, %s51
      %s54 = sphi 0, %s53
      %s68 = sphi 0, %s54
      %s72 = sphi 0, %s72
      %s74 = sphi 0, %s72
      %s75 = sphi 0, %s74
      %s89 = sphi 0, %s75
      %s93 = sphi 0, %s93
      %s95 = sphi 0, %s93
      %s96 = sphi 0, %s95
      %s110 = sphi 0, %s96
      %s114 = sphi 0, %s114
      %s116 = sphi 0, %s114
      %s117 = sphi 0, %s116
      %s131 = sphi 0, %s117
      %s135 = sphi 0, %s135
      %s137 = sphi 0, %s135
      %s138 = sphi 0, %s137
      %s152 = sphi 0, %s138
      %s156 = sphi 0, %s156
      %s158 = sphi 0, %s156
      %s159 = sphi 0, %s158
      %s173 = sphi 0, %s159
      %s179 = sphi 0, %s181
      %s182 = sphi 0, %s179
      %s183 = sphi 0, %s182
      %s199 = sphi 0, %s183
    $region4: #{binary_nn_forward.1} parent=1 // loop_header_branch
      %20 = sbr.rel (%p18) target = $region8
    $region5: #{binary_nn_forward.1} parent=1 // loop_body
      %s22 = ssub.s32 %s17, 1
      %s23 = ssub.s32 %s17, 2
      %s24 = sadd.s32 %s17, 1
      %s25 = ssub.s32 %s17, %s24
      %p26 = scmp.eq.s32.totalorder %s25, 0
      %s28 = sadd.s32 %s27, 1
      %s29 = scalar_select %p26, %s27, %s28
      %p32 = pneg %p26
      %p33 = scmp.eq.s32.totalorder %s17, 2
      %p34 = por %p32, %p33
      %p35 = scmp.ne.s32.totalorder %s27, %s30
      %p36 = scmp.eq.s32.totalorder %s17, 0
      %p37 = por %p35, %p36
      %p38 = scmp.ne.s32.totalorder %s27, %s30
      %p39 = scmp.eq.s32.totalorder %s22, 2
      %p40 = por %p38, %p39
      %p41 = scmp.ne.s32.totalorder %s30, %s31
      %p42 = scmp.eq.s32.totalorder %s22, 0
      %p43 = por %p41, %p42
      %p44 = scmp.ne.s32.totalorder %s30, %s31
      %p45 = scmp.eq.s32.totalorder %s23, 2
      %p46 = por %p44, %p45
      %p48 = scmp.ne.s32.totalorder %s31, %s47
      %p49 = scmp.eq.s32.totalorder %s23, 0
      %p50 = por %p48, %p49
      %s52 = sadd.s32 %s51, 1
      %p55 = scmp.eq.s32.totalorder %s17, 2
      %p56 = scmp.ne.s32.totalorder %s51, %s53
      %p57 = scmp.eq.s32.totalorder %s17, 0
      %p58 = por %p56, %p57
      %p59 = scmp.ne.s32.totalorder %s51, %s53
      %p60 = scmp.eq.s32.totalorder %s22, 2
      %p61 = por %p59, %p60
      %p62 = scmp.ne.s32.totalorder %s53, %s54
      %p63 = scmp.eq.s32.totalorder %s22, 0
      %p64 = por %p62, %p63
      %p65 = scmp.ne.s32.totalorder %s53, %s54
      %p66 = scmp.eq.s32.totalorder %s23, 2
      %p67 = por %p65, %p66
      %p69 = scmp.ne.s32.totalorder %s54, %s68
      %p70 = scmp.eq.s32.totalorder %s23, 0
      %p71 = por %p69, %p70
      %s73 = sadd.s32 %s72, 1
      %p76 = scmp.eq.s32.totalorder %s17, 2
      %p77 = scmp.ne.s32.totalorder %s72, %s74
      %p78 = scmp.eq.s32.totalorder %s17, 0
      %p79 = por %p77, %p78
      %p80 = scmp.ne.s32.totalorder %s72, %s74
      %p81 = scmp.eq.s32.totalorder %s22, 2
      %p82 = por %p80, %p81
      %p83 = scmp.ne.s32.totalorder %s74, %s75
      %p84 = scmp.eq.s32.totalorder %s22, 0
      %p85 = por %p83, %p84
      %p86 = scmp.ne.s32.totalorder %s74, %s75
      %p87 = scmp.eq.s32.totalorder %s23, 2
      %p88 = por %p86, %p87
      %p90 = scmp.ne.s32.totalorder %s75, %s89
      %p91 = scmp.eq.s32.totalorder %s23, 0
      %p92 = por %p90, %p91
      %s94 = sadd.s32 %s93, 1
      %p97 = scmp.eq.s32.totalorder %s17, 2
      %p98 = scmp.ne.s32.totalorder %s93, %s95
      %p99 = scmp.eq.s32.totalorder %s17, 0
      %p100 = por %p98, %p99
      %p101 = scmp.ne.s32.totalorder %s93, %s95
      %p102 = scmp.eq.s32.totalorder %s22, 2
      %p103 = por %p101, %p102
      %p104 = scmp.ne.s32.totalorder %s95, %s96
      %p105 = scmp.eq.s32.totalorder %s22, 0
      %p106 = por %p104, %p105
      %p107 = scmp.ne.s32.totalorder %s95, %s96
      %p108 = scmp.eq.s32.totalorder %s23, 2
      %p109 = por %p107, %p108
      %p111 = scmp.ne.s32.totalorder %s96, %s110
      %p112 = scmp.eq.s32.totalorder %s23, 0
      %p113 = por %p111, %p112
      %s115 = sadd.s32 %s114, 1
      %p118 = scmp.eq.s32.totalorder %s17, 2
      %p119 = scmp.ne.s32.totalorder %s114, %s116
      %p120 = scmp.eq.s32.totalorder %s17, 0
      %p121 = por %p119, %p120
      %p122 = scmp.ne.s32.totalorder %s114, %s116
      %p123 = scmp.eq.s32.totalorder %s22, 2
      %p124 = por %p122, %p123
      %p125 = scmp.ne.s32.totalorder %s116, %s117
      %p126 = scmp.eq.s32.totalorder %s22, 0
      %p127 = por %p125, %p126
      %p128 = scmp.ne.s32.totalorder %s116, %s117
      %p129 = scmp.eq.s32.totalorder %s23, 2
      %p130 = por %p128, %p129
      %p132 = scmp.ne.s32.totalorder %s117, %s131
      %p133 = scmp.eq.s32.totalorder %s23, 0
      %p134 = por %p132, %p133
      %s136 = sadd.s32 %s135, 1
      %p139 = scmp.eq.s32.totalorder %s17, 2
      %p140 = scmp.ne.s32.totalorder %s135, %s137
      %p141 = scmp.eq.s32.totalorder %s17, 0
      %p142 = por %p140, %p141
      %p143 = scmp.ne.s32.totalorder %s135, %s137
      %p144 = scmp.eq.s32.totalorder %s22, 2
      %p145 = por %p143, %p144
      %p146 = scmp.ne.s32.totalorder %s137, %s138
      %p147 = scmp.eq.s32.totalorder %s22, 0
      %p148 = por %p146, %p147
      %p149 = scmp.ne.s32.totalorder %s137, %s138
      %p150 = scmp.eq.s32.totalorder %s23, 2
      %p151 = por %p149, %p150
      %p153 = scmp.ne.s32.totalorder %s138, %s152
      %p154 = scmp.eq.s32.totalorder %s23, 0
      %p155 = por %p153, %p154
      %s157 = sadd.s32 %s156, 1
      %p160 = scmp.eq.s32.totalorder %s17, 2
      %p161 = scmp.ne.s32.totalorder %s156, %s158
      %p162 = scmp.eq.s32.totalorder %s17, 0
      %p163 = por %p161, %p162
      %p164 = scmp.ne.s32.totalorder %s156, %s158
      %p165 = scmp.eq.s32.totalorder %s22, 2
      %p166 = por %p164, %p165
      %p167 = scmp.ne.s32.totalorder %s158, %s159
      %p168 = scmp.eq.s32.totalorder %s22, 0
      %p169 = por %p167, %p168
      %p170 = scmp.ne.s32.totalorder %s158, %s159
      %p171 = scmp.eq.s32.totalorder %s23, 2
      %p172 = por %p170, %p171
      %p174 = scmp.ne.s32.totalorder %s159, %s173
      %p175 = scmp.eq.s32.totalorder %s23, 0
      %p176 = por %p174, %p175
      %s177 = ssub.s32 %s17, %s24
      %p178 = scmp.eq.s32.totalorder %s177, 0
      %s180 = sadd.s32 %s179, 1
      %s181 = scalar_select %p178, %s179, %s180
      %p184 = pneg %p178
      %p185 = scmp.eq.s32.totalorder %s17, 2
      %p186 = por %p184, %p185
      %p187 = scmp.ne.s32.totalorder %s179, %s182
      %p188 = scmp.eq.s32.totalorder %s17, 0
      %p189 = por %p187, %p188
      %p190 = scmp.ne.s32.totalorder %s179, %s182
      %p191 = scmp.eq.s32.totalorder %s22, 2
      %p192 = por %p190, %p191
      %p193 = scmp.ne.s32.totalorder %s182, %s183
      %p194 = scmp.eq.s32.totalorder %s22, 0
      %p195 = por %p193, %p194
      %p196 = scmp.ne.s32.totalorder %s182, %s183
      %p197 = scmp.eq.s32.totalorder %s23, 2
      %p198 = por %p196, %p197
      %p200 = scmp.ne.s32.totalorder %s183, %s199
      %p201 = scmp.eq.s32.totalorder %s23, 0
      %p202 = por %p200, %p201
      %p203 = scmp.le.s32.totalorder 1, %s17
      %p204 = scmp.lt.s32.totalorder %s17, 4
      %p205 = pnand %p203, %p204
      %p206 = pneg %p205
      // Predicated region
      $region9: #{binary_nn_forward.1} parent=5 // pred_check
        _
      $region10: #{binary_nn_forward.1} parent=5 // pred_check_branch
        %208 = sbr.rel (%p205) target = $region12
      $region11: #{binary_nn_forward.1} parent=5 // pred_region
        %s209 = ssub.s32 %s17, 1
        // Predicated region
        $region13: #{binary_nn_forward.1} parent=11 // pred_check
          %p210 = pneg %p64
        $region14: #{binary_nn_forward.1} parent=11 // pred_check_branch
          %212 = sbr.rel (%p210) target = $region16
        $region15: #{binary_nn_forward.1} parent=11 // pred_region
          _
        $region16: #{binary_nn_forward.1} parent=11 // pred_fallthru
          _
        // Predicated region
        $region17: #{binary_nn_forward.1} parent=11 // pred_check
          %p213 = pneg %p85
        $region18: #{binary_nn_forward.1} parent=11 // pred_check_branch
          %215 = sbr.rel (%p213) target = $region20
        $region19: #{binary_nn_forward.1} parent=11 // pred_region
          _
        $region20: #{binary_nn_forward.1} parent=11 // pred_fallthru
          _
        // Predicated region
        $region21: #{binary_nn_forward.1} parent=11 // pred_check
          %p216 = pneg %p106
        $region22: #{binary_nn_forward.1} parent=11 // pred_check_branch
          %218 = sbr.rel (%p216) target = $region24
        $region23: #{binary_nn_forward.1} parent=11 // pred_region
          _
        $region24: #{binary_nn_forward.1} parent=11 // pred_fallthru
          _
        // Predicated region
        $region25: #{binary_nn_forward.1} parent=11 // pred_check
          %p219 = pneg %p127
        $region26: #{binary_nn_forward.1} parent=11 // pred_check_branch
          %221 = sbr.rel (%p219) target = $region28
        $region27: #{binary_nn_forward.1} parent=11 // pred_region
          _
        $region28: #{binary_nn_forward.1} parent=11 // pred_fallthru
          _
        // Predicated region
        $region29: #{binary_nn_forward.1} parent=11 // pred_check
          %p222 = pneg %p148
        $region30: #{binary_nn_forward.1} parent=11 // pred_check_branch
          %224 = sbr.rel (%p222) target = $region32
        $region31: #{binary_nn_forward.1} parent=11 // pred_region
          _
        $region32: #{binary_nn_forward.1} parent=11 // pred_fallthru
          _
        // Predicated region
        $region33: #{binary_nn_forward.1} parent=11 // pred_check
          %p225 = pneg %p169
        $region34: #{binary_nn_forward.1} parent=11 // pred_check_branch
          %227 = sbr.rel (%p225) target = $region36
        $region35: #{binary_nn_forward.1} parent=11 // pred_region
          _
        $region36: #{binary_nn_forward.1} parent=11 // pred_fallthru
          _
      $region12: #{binary_nn_forward.1} parent=5 // pred_fallthru
        _
      %p228 = scmp.lt.s32.totalorder %s17, 3
      // Predicated region
      $region37: #{binary_nn_forward.1} parent=5 // pred_check
        %p229 = pneg %p228
      $region38: #{binary_nn_forward.1} parent=5 // pred_check_branch
        %231 = sbr.rel (%p229) target = $region40
      $region39: #{binary_nn_forward.1} parent=5 // pred_region
        // Predicated region
        $region41: #{binary_nn_forward.1} parent=39 // pred_check
          %p232 = pneg %p37
        $region42: #{binary_nn_forward.1} parent=39 // pred_check_branch
          %234 = sbr.rel (%p232) target = $region44
        $region43: #{binary_nn_forward.1} parent=39 // pred_region
          %s235 = smul.u32 16, %s17
          %s236 = ssub.s32 38, %s235
          %p237 = scmp.lt.s32.totalorder %s236, 16
          %s238 = scalar_select %p237, %s236, 16
          %s239 = smul.u32 8, %s238
          %p240 = scmp.lt.s32.totalorder %s235, 37
          %s241 = scalar_select %p240, %s235, 37
          %s242 = smul.addr %s241, 8
          %s243 = scalar_lea.vmem %s0, %s242
          %s244 = smul.u32 16, %s17
          %s245 = ssub.s32 38, %s244
          %p246 = scmp.lt.s32.totalorder %s245, 16
          %s247 = scalar_select %p246, %s245, 16
          %s248 = smul.u32 8, %s247
        $region44: #{binary_nn_forward.1} parent=39 // pred_fallthru
          _
      $region40: #{binary_nn_forward.1} parent=5 // pred_fallthru
        _
      %p249 = scmp.le.s32.totalorder 1, %s17
      %p250 = scmp.lt.s32.totalorder %s17, 4
      %p251 = pnand %p249, %p250
      %p252 = pneg %p251
      // Predicated region
      $region45: #{binary_nn_forward.1} parent=5 // pred_check
        _
      $region46: #{binary_nn_forward.1} parent=5 // pred_check_branch
        %254 = sbr.rel (%p251) target = $region48
      $region47: #{binary_nn_forward.1} parent=5 // pred_region
        %s255 = ssub.s32 %s17, 1
        %s256 = smul.u32 16, %s22
        %s257 = ssub.s32 38, %s256
        %p258 = scmp.lt.s32.totalorder %s257, 16
        %s259 = scalar_select %p258, %s257, 16
        %s260 = smul.u32 8, %s259
        %p261 = scmp.lt.s32.totalorder %s256, 37
        %s262 = scalar_select %p261, %s256, 37
        %s263 = smul.addr %s262, 8
        %s264 = scalar_lea.vmem %s0, %s263
        %p265 = pneg %p43
        %p266 = pneg %p40
        %p267 = pneg %p64
        %p268 = pneg %p61
        %p269 = pneg %p85
        %p270 = pneg %p82
        %p271 = pneg %p106
        %p272 = pneg %p103
        %p273 = pneg %p127
        %p274 = pneg %p124
        %p275 = pneg %p148
        %p276 = pneg %p145
        %p277 = pneg %p169
        %p278 = pneg %p166
        %p279 = pneg %p195
        %p280 = pneg %p192
        %s281 = sand.u32 %s182, 1
        %s282 = scalar_lea.sflag [#allocation4], %s281
        %s283 = sand.u32 %s182, 1
        %s284 = scalar_lea.vmem [#allocation3], %s283
        %s285 = smul.u32 16, %s22
        %s286 = ssub.s32 38, %s285
        %p287 = scmp.lt.s32.totalorder %s286, 16
        %s288 = scalar_select %p287, %s286, 16
        %s289 = smul.u32 8, %s288
        %p290 = scmp.lt.s32.totalorder %s285, 37
        %s291 = scalar_select %p290, %s285, 37
        %s292 = smul.addr %s291, 8
        %s293 = scalar_lea.vmem %s0, %s292
        %s294 = smul.u32 16, %s22
        %s295 = ssub.s32 38, %s294
        %p296 = scmp.lt.s32.totalorder %s295, 16
        %s297 = scalar_select %p296, %s295, 16
        %s298 = smul.u32 8, %s297
        %v300 = vld [vmem:[%s293] sm:$0xff]
        %v301 = vld [vmem:[%s293 + $0x8] sm:$0xff]
        %v302 = vld [vmem:[%s293 + $0x10] sm:$0xff]
        %v303 = vld [vmem:[%s293 + $0x18] sm:$0xff]
        %v304 = vld [vmem:[%s293 + $0x20] sm:$0xff]
        %v305 = vld [vmem:[%s293 + $0x28] sm:$0xff]
        %v306 = vld [vmem:[%s293 + $0x30] sm:$0xff]
        %v307 = vld [vmem:[%s293 + $0x38] sm:$0xff]
        %v308 = vld [vmem:[%s293 + $0x40] sm:$0xff]
        %v309 = vld [vmem:[%s293 + $0x48] sm:$0xff]
        %v310 = vld [vmem:[%s293 + $0x50] sm:$0xff]
        %v311 = vld [vmem:[%s293 + $0x58] sm:$0xff]
        %v312 = vld [vmem:[%s293 + $0x60] sm:$0xff]
        %v313 = vld [vmem:[%s293 + $0x68] sm:$0xff]
        %v314 = vld [vmem:[%s293 + $0x70] sm:$0xff]
        %v315 = vld [vmem:[%s293 + $0x78] sm:$0xff]
        %v316 = vpack.c.bf16 %v301, %v300
        %v317 = vpack.c.bf16 %v303, %v302
        %v318 = vpack.c.bf16 %v305, %v304
        %v319 = vpack.c.bf16 %v307, %v306
        %v320 = vpack.c.bf16 %v309, %v308
        %v321 = vpack.c.bf16 %v311, %v310
        %v322 = vpack.c.bf16 %v313, %v312
        %v323 = vpack.c.bf16 %v315, %v314
        %v324 = vld [vmem:[%s1] sm:$0xf]
        %v325 = vld [vmem:[%s1 + $0x4] sm:$0xf]
        %v326 = vld [vmem:[%s1 + $0x8] sm:$0xf]
        %v327 = vld [vmem:[%s1 + $0xc] sm:$0xf]
        %v328 = vld [vmem:[%s2] sm:$0x1]
        %v330 = vperm.slane %v328, 0
        %v336 = vunpack.c.l.b16 %v324
        %v337 = vunpack.c.l.b16 %v325
        %v338 = vunpack.c.l.b16 %v326
        %v339 = vunpack.c.l.b16 %v327
        %v340 = vpack.c.b16 %v337, %v336
        %v341 = vpack.c.b16 %v339, %v338
        %vm344 = vcmask 261120
        %v346 = vsel %vm344, %v316, 0
        %v349 = vsel %vm344, %v317, 0
        %v352 = vsel %vm344, %v318, 0
        %v355 = vsel %vm344, %v319, 0
        %v358 = vsel %vm344, %v320, 0
        %v361 = vsel %vm344, %v321, 0
        %v364 = vsel %vm344, %v322, 0
        %v367 = vsel %vm344, %v323, 0
        %369 = vmatpush.bf16.msra.mxu0 0
        %370 = vmatpush.bf16.msra.mxu0 0
        %371 = vmatpush.bf16.msra.mxu0 0
        %372 = vmatpush.bf16.msra.mxu0 0
        %373 = vmatpush.bf16.msra.mxu0 0
        %374 = vmatpush.bf16.msra.mxu0 0
        %375 = vmatpush.bf16.msra.mxu0 %v341
        %376 = vmatpush.bf16.msra.mxu0 %v340
        %377 = vmatmul.bf16.gmra.mxu0 %v346
        %v378 = vpop.f32.mrf.mxu0
        %v379 = vadd.f32 %v330, %v378
        %v380 = vpop.f32.mrf.mxu0
        %v381 = vadd.f32 %v330, %v380
        %382 = vmatmul.bf16.gmra.mxu0 %v349
        %v383 = vpop.f32.mrf.mxu0
        %v384 = vadd.f32 %v330, %v383
        %v385 = vpop.f32.mrf.mxu0
        %v386 = vadd.f32 %v330, %v385
        %387 = vmatmul.bf16.gmra.mxu0 %v352
        %v388 = vpop.f32.mrf.mxu0
        %v389 = vadd.f32 %v330, %v388
        %v390 = vpop.f32.mrf.mxu0
        %v391 = vadd.f32 %v330, %v390
        %392 = vmatmul.bf16.gmra.mxu0 %v355
        %v393 = vpop.f32.mrf.mxu0
        %v394 = vadd.f32 %v330, %v393
        %v395 = vpop.f32.mrf.mxu0
        %v396 = vadd.f32 %v330, %v395
        %397 = vmatmul.bf16.gmra.mxu0 %v358
        %v398 = vpop.f32.mrf.mxu0
        %v399 = vadd.f32 %v330, %v398
        %v400 = vpop.f32.mrf.mxu0
        %v401 = vadd.f32 %v330, %v400
        %402 = vmatmul.bf16.gmra.mxu0 %v361
        %v403 = vpop.f32.mrf.mxu0
        %v404 = vadd.f32 %v330, %v403
        %v405 = vpop.f32.mrf.mxu0
        %v406 = vadd.f32 %v330, %v405
        %407 = vmatmul.bf16.gmra.mxu0 %v364
        %v408 = vpop.f32.mrf.mxu0
        %v409 = vadd.f32 %v330, %v408
        %v410 = vpop.f32.mrf.mxu0
        %v411 = vadd.f32 %v330, %v410
        %412 = vmatmul.bf16.gmra.mxu0 %v367
        %v413 = vpop.f32.mrf.mxu0
        %v414 = vadd.f32 %v330, %v413
        %v415 = vpop.f32.mrf.mxu0
        %v416 = vadd.f32 %v330, %v415
        %417 = vdwg.mxu0
        %v418 = vmax.f32 %v379, 0.0
        %v419 = vmax.f32 %v381, 0.0
        %v420 = vmax.f32 %v384, 0.0
        %v421 = vmax.f32 %v386, 0.0
        %v422 = vmax.f32 %v389, 0.0
        %v423 = vmax.f32 %v391, 0.0
        %v424 = vmax.f32 %v394, 0.0
        %v425 = vmax.f32 %v396, 0.0
        %v426 = vmax.f32 %v399, 0.0
        %v427 = vmax.f32 %v401, 0.0
        %v428 = vmax.f32 %v404, 0.0
        %v429 = vmax.f32 %v406, 0.0
        %v430 = vmax.f32 %v409, 0.0
        %v431 = vmax.f32 %v411, 0.0
        %v432 = vmax.f32 %v414, 0.0
        %v433 = vmax.f32 %v416, 0.0
        %v434 = vpack.c.bf16 %v419, %v418
        %v435 = vpack.c.bf16 %v421, %v420
        %v436 = vpack.c.bf16 %v423, %v422
        %v437 = vpack.c.bf16 %v425, %v424
        %v438 = vpack.c.bf16 %v427, %v426
        %v439 = vpack.c.bf16 %v429, %v428
        %v440 = vpack.c.bf16 %v431, %v430
        %v441 = vpack.c.bf16 %v433, %v432
        %v442 = vld [vmem:[%s3] sm:$0xf]
        %v443 = vld [vmem:[%s3 + $0x4] sm:$0xf]
        %v444 = vld [vmem:[%s3 + $0x8] sm:$0xf]
        %v445 = vld [vmem:[%s3 + $0xc] sm:$0xf]
        %v446 = vld [vmem:[%s3 + $0x10] sm:$0xf]
        %v447 = vld [vmem:[%s3 + $0x14] sm:$0xf]
        %v448 = vld [vmem:[%s3 + $0x18] sm:$0xf]
        %v449 = vld [vmem:[%s3 + $0x1c] sm:$0xf]
        %v450 = vld [vmem:[%s3 + $0x20] sm:$0xf]
        %v451 = vld [vmem:[%s3 + $0x24] sm:$0xf]
        %v452 = vld [vmem:[%s3 + $0x28] sm:$0xf]
        %v453 = vld [vmem:[%s3 + $0x2c] sm:$0xf]
        %v454 = vld [vmem:[%s3 + $0x30] sm:$0x3]
        %v455 = vld [vmem:[%s4] sm:$0x1]
        %v457 = vperm.slane %v455, 0
        %v472 = vunpack.c.l.b16 %v442
        %v473 = vunpack.c.l.b16 %v443
        %v474 = vunpack.c.l.b16 %v444
        %v475 = vunpack.c.l.b16 %v445
        %v476 = vunpack.c.l.b16 %v446
        %v477 = vunpack.c.l.b16 %v447
        %v478 = vunpack.c.l.b16 %v448
        %v479 = vunpack.c.l.b16 %v449
        %v480 = vunpack.c.l.b16 %v450
        %v481 = vunpack.c.l.b16 %v451
        %v482 = vunpack.c.l.b16 %v452
        %v483 = vunpack.c.l.b16 %v453
        %v484 = vunpack.c.l.b16 %v454
        %v485 = vpack.c.b16 %v473, %v472
        %v486 = vpack.c.b16 %v475, %v474
        %v487 = vpack.c.b16 %v477, %v476
        %v488 = vpack.c.b16 %v479, %v478
        %v489 = vpack.c.b16 %v481, %v480
        %v490 = vpack.c.b16 %v483, %v482
        %v491 = vpack.c.b16 %v484, %v484
        %vm498 = vcmask 818176
        %v500 = vsel %vm498, %v434, 0
        %v503 = vsel %vm498, %v435, 0
        %v506 = vsel %vm498, %v436, 0
        %v509 = vsel %vm498, %v437, 0
        %v512 = vsel %vm498, %v438, 0
        %v515 = vsel %vm498, %v439, 0
        %v518 = vsel %vm498, %v440, 0
        %v521 = vsel %vm498, %v441, 0
        %vm523 = vcmask 1041408
        %v525 = vsel %vm523, %v491, 0
        %527 = vmatpush.bf16.msra.mxu0 0
        %528 = vmatpush.bf16.msra.mxu0 %v525
        %529 = vmatpush.bf16.msra.mxu0 %v490
        %530 = vmatpush.bf16.msra.mxu0 %v489
        %531 = vmatpush.bf16.msra.mxu0 %v488
        %532 = vmatpush.bf16.msra.mxu0 %v487
        %533 = vmatpush.bf16.msra.mxu0 %v486
        %534 = vmatpush.bf16.msra.mxu0 %v485
        %535 = vmatmul.bf16.gmra.mxu0 %v500
        %v536 = vpop.f32.mrf.mxu0
        %v537 = vadd.f32 %v457, %v536
        %v538 = vpop.f32.mrf.mxu0
        %v539 = vadd.f32 %v457, %v538
        %540 = vmatmul.bf16.gmra.mxu0 %v503
        %v541 = vpop.f32.mrf.mxu0
        %v542 = vadd.f32 %v457, %v541
        %v543 = vpop.f32.mrf.mxu0
        %v544 = vadd.f32 %v457, %v543
        %545 = vmatmul.bf16.gmra.mxu0 %v506
        %v546 = vpop.f32.mrf.mxu0
        %v547 = vadd.f32 %v457, %v546
        %v548 = vpop.f32.mrf.mxu0
        %v549 = vadd.f32 %v457, %v548
        %550 = vmatmul.bf16.gmra.mxu0 %v509
        %v551 = vpop.f32.mrf.mxu0
        %v552 = vadd.f32 %v457, %v551
        %v553 = vpop.f32.mrf.mxu0
        %v554 = vadd.f32 %v457, %v553
        %555 = vmatmul.bf16.gmra.mxu0 %v512
        %v556 = vpop.f32.mrf.mxu0
        %v557 = vadd.f32 %v457, %v556
        %v558 = vpop.f32.mrf.mxu0
        %v559 = vadd.f32 %v457, %v558
        %560 = vmatmul.bf16.gmra.mxu0 %v515
        %v561 = vpop.f32.mrf.mxu0
        %v562 = vadd.f32 %v457, %v561
        %v563 = vpop.f32.mrf.mxu0
        %v564 = vadd.f32 %v457, %v563
        %565 = vmatmul.bf16.gmra.mxu0 %v518
        %v566 = vpop.f32.mrf.mxu0
        %v567 = vadd.f32 %v457, %v566
        %v568 = vpop.f32.mrf.mxu0
        %v569 = vadd.f32 %v457, %v568
        %570 = vmatmul.bf16.gmra.mxu0 %v521
        %v571 = vpop.f32.mrf.mxu0
        %v572 = vadd.f32 %v457, %v571
        %v573 = vpop.f32.mrf.mxu0
        %v574 = vadd.f32 %v457, %v573
        %575 = vdwg.mxu0
        %v576 = vmax.f32 %v537, 0.0
        %v577 = vmax.f32 %v539, 0.0
        %v578 = vmax.f32 %v542, 0.0
        %v579 = vmax.f32 %v544, 0.0
        %v580 = vmax.f32 %v547, 0.0
        %v581 = vmax.f32 %v549, 0.0
        %v582 = vmax.f32 %v552, 0.0
        %v583 = vmax.f32 %v554, 0.0
        %v584 = vmax.f32 %v557, 0.0
        %v585 = vmax.f32 %v559, 0.0
        %v586 = vmax.f32 %v562, 0.0
        %v587 = vmax.f32 %v564, 0.0
        %v588 = vmax.f32 %v567, 0.0
        %v589 = vmax.f32 %v569, 0.0
        %v590 = vmax.f32 %v572, 0.0
        %v591 = vmax.f32 %v574, 0.0
        %v592 = vld [vmem:[%s5] sm:$0x1]
        %s593 = sld [smem:[#allocation2]]
        %v594 = vstv %s593
        %vm595 = vcmask 162816
        %v597 = vsel %vm595, %v592, 0
        %v600 = vsel %vm595, %v576, 0
        %v603 = vsel %vm595, %v577, 0
        %v606 = vsel %vm595, %v578, 0
        %v609 = vsel %vm595, %v579, 0
        %v612 = vsel %vm595, %v580, 0
        %v615 = vsel %vm595, %v581, 0
        %v618 = vsel %vm595, %v582, 0
        %v621 = vsel %vm595, %v583, 0
        %v624 = vsel %vm595, %v584, 0
        %v627 = vsel %vm595, %v585, 0
        %v630 = vsel %vm595, %v586, 0
        %v633 = vsel %vm595, %v587, 0
        %v636 = vsel %vm595, %v588, 0
        %v639 = vsel %vm595, %v589, 0
        %v642 = vsel %vm595, %v590, 0
        %v645 = vsel %vm595, %v591, 0
        %647 = vmatpush.xpose.msra.mxu0 %v645
        %648 = vmatpush.xpose.msra.mxu0 %v642
        %649 = vmatpush.xpose.msra.mxu0 %v639
        %650 = vmatpush.xpose.msra.mxu0 %v636
        %651 = vmatpush.xpose.msra.mxu0 %v633
        %652 = vmatpush.xpose.msra.mxu0 %v630
        %653 = vmatpush.xpose.msra.mxu0 %v627
        %654 = vmatpush.xpose.msra.mxu0 %v624
        %655 = vmatpush.xpose.msra.mxu0 %v621
        %656 = vmatpush.xpose.msra.mxu0 %v618
        %657 = vmatpush.xpose.msra.mxu0 %v615
        %658 = vmatpush.xpose.msra.mxu0 %v612
        %659 = vmatpush.xpose.msra.mxu0 %v609
        %660 = vmatpush.xpose.msra.mxu0 %v606
        %661 = vmatpush.xpose.msra.mxu0 %v603
        %662 = vmatpush.xpose.msra.mxu0 %v600
        %663 = vmatmul.f32.gmra.mxu0 %v597
        %v664 = vpop.f32.mrf.mxu0
        %v665 = vadd.f32 %v594, %v664
        %666 = vdwg.mxu0
        %v667 = vxor.u32 %v665, 2147483648
        %v668 = vmul.f32 %v667, 1.442695
        %v669 = vpow.pop %v668
        %v670 = vadd.f32 %v669, 1.0
        %v671 = vrcp.pop %v670
        %v672 = vmul.f32 %v670, %v671
        %v673 = vsub.f32 1.0, %v672
        %v674 = vmul.f32 %v671, %v673
        %v675 = vadd.f32 %v671, %v674
        %vm676 = vweird.f32 %v670
        %vm677 = vweird.f32 %v671
        %vm678 = vmor %vm676, %vm677
        %v679 = vsel %vm678, %v671, %v675
        %v680 = vand.u32 2147483647, %v670
        %vm681 = vcmp.eq.f32.partialorder %v680, 8.507059e+37
        %v682 = vand.u32 %v670, 2147483648
        %v683 = vor.u32 1.1754944e-38, %v682
        %v684 = vsel %vm681, %v683, %v679
        %v685 = vmul.f32 1.0, %v684
        %686 = vst [vmem:[%s284] sm:$0x1] %v685
        %s687 = sand.u32 %s182, 1
        %s688 = scalar_lea.sflag [#allocation4], %s687
        %s689 = sand.u32 %s182, 1
        %s690 = scalar_lea.vmem [#allocation3], %s689
        // Predicated region
        $region49: #{binary_nn_forward.1} parent=47 // pred_check
          %p691 = pneg %p192
        $region50: #{binary_nn_forward.1} parent=47 // pred_check_branch
          %693 = sbr.rel (%p691) target = $region52
        $region51: #{binary_nn_forward.1} parent=47 // pred_region
          %695 = vsyncadd %s688, 0
          %s696 = scalar_lea.hbm %s7, %s22
          %s698 = sshll.u32 %s690, 4
          %s699 = int_to_ptr.vmem [resolvable:$true] %s698
          %s700 = sshll.u32 %s696, 4
          %s701 = int_to_ptr.hbm [resolvable:$true] %s700
          %703 = dma.vmem_to_hbm [thread:$0]  %s699, 16, %s701, %s688
        $region52: #{binary_nn_forward.1} parent=47 // pred_fallthru
          _
      $region48: #{binary_nn_forward.1} parent=5 // pred_fallthru
        _
      %p704 = scmp.le.s32.totalorder 2, %s17
      // Predicated region
      $region53: #{binary_nn_forward.1} parent=5 // pred_check
        %p705 = pneg %p704
      $region54: #{binary_nn_forward.1} parent=5 // pred_check_branch
        %707 = sbr.rel (%p705) target = $region56
      $region55: #{binary_nn_forward.1} parent=5 // pred_region
        %s708 = ssub.s32 %s17, 2
        // Predicated region
        $region57: #{binary_nn_forward.1} parent=55 // pred_check
          %p709 = pneg %p198
        $region58: #{binary_nn_forward.1} parent=55 // pred_check_branch
          %711 = sbr.rel (%p709) target = $region60
        $region59: #{binary_nn_forward.1} parent=55 // pred_region
          %s712 = sand.u32 %s183, 1
          %s713 = scalar_lea.sflag [#allocation4], %s712
          %s714 = sand.u32 %s183, 1
          %s715 = scalar_lea.vmem [#allocation3], %s714
          %717 = dma.done %s713, 16
        $region60: #{binary_nn_forward.1} parent=55 // pred_fallthru
          _
      $region56: #{binary_nn_forward.1} parent=5 // pred_fallthru
        _
    $region6: #{binary_nn_forward.1} parent=1 // loop_footer
      %s21 = sadd.s32 1, %s17
    $region7: #{binary_nn_forward.1} parent=1 // loop_footer_branch
      %16 = sbr.rel target = $region3
    $region8: #{binary_nn_forward.1} parent=1 // loop_exit
      _
    %718 = vsyncpa [#allocation4], 1
    %s719 = scalar_lea.sflag [#allocation4], 1
    %720 = vsyncpa %s719, 1

</llo_original>
